<compile_context>
chip_gen: v7x
topology: tpu7x:2x2x1
jax: 0.10.0
libtpu: 0.0.40
codegen_flags: <defaults>
</compile_context>

<pallas_src>
import functools

import jax
import jax.numpy as jnp
from jax.experimental import pallas as pl
from jax.experimental.pallas import tpu as pltpu

BN_EPS = 1e-5


def basic_conv_kernel(wt_ref, patch_ref, gamma_ref, beta_ref, o_ref):
    """Fused conv(im2col matmul) + batchnorm(train) + relu, channel-major layout.

    wt_ref:    (Cout, K)   weights, K = s*s*Cin
    patch_ref: (K, M)      im2col patches, M = N*H*W (lane-dense)
    gamma_ref: (Cout, 1)   BN scale
    beta_ref:  (Cout, 1)   BN shift
    o_ref:     (Cout, M)   output (lane-dense last dim, multiple of 128)
    """
    # ---- convolution: single MXU matmul, accumulate in f32
    y = jnp.dot(wt_ref[...], patch_ref[...],
                preferred_element_type=jnp.float32)          # (Cout, M)

    # ---- BatchNorm2d (training mode): one-pass per-channel stats over M = N*H*W
    m = y.shape[1]
    inv_n = 1.0 / m
    s1 = jnp.sum(y, axis=1, keepdims=True)                   # (Cout, 1)
    s2 = jnp.sum(y * y, axis=1, keepdims=True)                # (Cout, 1)
    mean = s1 * inv_n
    var = s2 * inv_n - mean * mean

    # ---- fold normalize + affine into one FMA, then ReLU
    scale = gamma_ref[...] * jax.lax.rsqrt(var + BN_EPS)      # (Cout, 1)
    shift = beta_ref[...] - mean * scale                      # (Cout, 1)
    o_ref[...] = jnp.maximum(y * scale + shift, 0.0)


@functools.partial(jax.jit, static_argnames=("s",))
def basic_conv(x_nchw, w_oihw, bias, gamma, beta, *, s):
    """Wrapper: NCHW in / NCHW out, matching the PyTorch module semantics."""
    N, Cin, H, W = x_nchw.shape
    Cout = w_oihw.shape[0]
    pad = (s - 1) // 2
    K = s * s * Cin
    M = N * H * W

    # ---- im2col in the wrapper (layout plumbing stays out of the kernel)
    x_nhwc = jnp.transpose(x_nchw, (0, 2, 3, 1)).astype(jnp.float32)
    x_pad = jnp.pad(x_nhwc, ((0, 0), (pad, pad), (pad, pad), (0, 0)))
    taps = [x_pad[:, kh:kh + H, kw:kw + W, :] for kh in range(s) for kw in range(s)]
    patches = jnp.stack(taps, axis=3)                 # (N, H, W, s*s, Cin)
    patches = patches.reshape(M, K).T                 # (K, M) — M (=512 here) on lanes

    # weights: (Cout, Cin, kh, kw) -> (kh, kw, Cin, Cout) -> (K, Cout) -> (Cout, K)
    wt = jnp.transpose(w_oihw, (2, 3, 1, 0)).reshape(K, Cout).astype(jnp.float32).T

    # conv bias is mathematically cancelled by the train-mode BN mean subtraction.
    del bias

    gamma2 = gamma.reshape(Cout, 1).astype(jnp.float32)
    beta2 = beta.reshape(Cout, 1).astype(jnp.float32)

    cost = pl.CostEstimate(
        flops=2 * Cout * K * M + 6 * Cout * M,
        transcendentals=Cout,
        bytes_accessed=4 * (Cout * K + K * M + 2 * Cout + Cout * M),
    )

    out = pl.pallas_call(
        basic_conv_kernel,
        out_shape=jax.ShapeDtypeStruct((Cout, M), jnp.float32),
        grid=(1,),
        in_specs=[
            pl.BlockSpec((Cout, K), lambda i: (0, 0)),
            pl.BlockSpec((K, M), lambda i: (0, 0)),
            pl.BlockSpec((Cout, 1), lambda i: (0, 0)),
            pl.BlockSpec((Cout, 1), lambda i: (0, 0)),
        ],
        out_specs=pl.BlockSpec((Cout, M), lambda i: (0, 0)),
        compiler_params=pltpu.CompilerParams(
            dimension_semantics=("arbitrary",)),
        cost_estimate=cost,
    )(wt, patches, gamma2, beta2)

    # (Cout, N*H*W) -> (Cout, N, H, W) -> (N, Cout, H, W)
    return jnp.transpose(out.reshape(Cout, N, H, W), (1, 0, 2, 3))


def reference_basic_conv(x_nchw, w_oihw, bias, gamma, beta, *, s):
    """Pure-JAX reference of the PyTorch forward (training-mode BatchNorm)."""
    pad = (s - 1) // 2
    y = jax.lax.conv_general_dilated(
        x_nchw, w_oihw, window_strides=(1, 1),
        padding=((pad, pad), (pad, pad)),
        dimension_numbers=("NCHW", "OIHW", "NCHW"))
    y = y + bias.reshape(1, -1, 1, 1)
    mean = jnp.mean(y, axis=(0, 2, 3), keepdims=True)
    var = jnp.mean(jnp.square(y - mean), axis=(0, 2, 3), keepdims=True)
    y_hat = (y - mean) * jax.lax.rsqrt(var + BN_EPS)
    z = y_hat * gamma.reshape(1, -1, 1, 1) + beta.reshape(1, -1, 1, 1)
    return jnp.maximum(z, 0.0)


if __name__ == "__main__":
    # BasicConv(inchannel=4, outchannel=8, s=3); input (N=2, C=4, H=16, W=16), NCHW like PyTorch.
    N, Cin, Cout, H, W, s = 2, 4, 8, 16, 16, 3

    key = jax.random.PRNGKey(0)
    k_x, k_w, k_b, k_g, k_beta = jax.random.split(key, 5)

    x = jax.random.normal(k_x, (N, Cin, H, W), dtype=jnp.float32)
    # deterministic synthetic parameters (shapes match nn.Conv2d / nn.BatchNorm2d init)
    w = jax.random.normal(k_w, (Cout, Cin, s, s), dtype=jnp.float32) * 0.1
    bias = jax.random.normal(k_b, (Cout,), dtype=jnp.float32) * 0.1
    gamma = 1.0 + 0.1 * jax.random.normal(k_g, (Cout,), dtype=jnp.float32)
    beta = 0.1 * jax.random.normal(k_beta, (Cout,), dtype=jnp.float32)

    out = basic_conv(x, w, bias, gamma, beta, s=s)
    out = jax.block_until_ready(out)

    ref = reference_basic_conv(x, w, bias, gamma, beta, s=s)
    assert out.shape == (N, Cout, H, W), out.shape
    assert jnp.allclose(out, ref, atol=1e-4, rtol=1e-4), float(jnp.max(jnp.abs(out - ref)))

    print("KERNEL_OK")
</pallas_src>

<mosaic_0001>
module attributes {stable_mosaic.version = 11 : i64} {
  func.func @basic_conv_kernel(%arg0: i32, %arg1: memref<8x36xf32, #tpu.memory_space<vmem>>, %arg2: memref<36x512xf32, #tpu.memory_space<vmem>>, %arg3: memref<8x1xf32, #tpu.memory_space<vmem>>, %arg4: memref<8x1xf32, #tpu.memory_space<vmem>>, %arg5: memref<8x512xf32, #tpu.memory_space<vmem>>) attributes {dimension_semantics = [#tpu.dimension_semantics<arbitrary>], iteration_bounds = array<i64: 1>, scalar_prefetch = 0 : i64, scratch_operands = 0 : i64, tpu.core_type = #tpu.core_type<tc>, window_params = [{pipeline_mode = #tpu.pipeline_mode<synchronous>, transform_indices = @transform_0, window_bounds = array<i64: 8, 36>}, {pipeline_mode = #tpu.pipeline_mode<synchronous>, transform_indices = @transform_1, window_bounds = array<i64: 36, 512>}, {pipeline_mode = #tpu.pipeline_mode<synchronous>, transform_indices = @transform_2, window_bounds = array<i64: 8, 1>}, {pipeline_mode = #tpu.pipeline_mode<synchronous>, transform_indices = @transform_3, window_bounds = array<i64: 8, 1>}, {pipeline_mode = #tpu.pipeline_mode<synchronous>, transform_indices = @transform_4, window_bounds = array<i64: 8, 512>}]} {
    %c0 = arith.constant 0 : index
    %c0_0 = arith.constant 0 : index
    %0 = vector.load %arg1[%c0, %c0_0] : memref<8x36xf32, #tpu.memory_space<vmem>>, vector<8x36xf32>
    %c0_1 = arith.constant 0 : index
    %c0_2 = arith.constant 0 : index
    %1 = vector.load %arg2[%c0_1, %c0_2] : memref<36x512xf32, #tpu.memory_space<vmem>>, vector<36x512xf32>
    %cst = arith.constant dense<0.000000e+00> : vector<8x512xf32>
    %2 = tpu.matmul %0, %1, %cst {dimension_numbers = #tpu.dot_dimension_numbers<[1], [0], [0], [1], [0, 0, 1, 1], [], []>} : vector<8x36xf32>, vector<36x512xf32>, vector<8x512xf32> -> vector<8x512xf32>
    %cst_3 = arith.constant dense<0.000000e+00> : vector<8xf32>
    %3 = vector.multi_reduction <add>, %2, %cst_3 [1] : vector<8x512xf32> to vector<8xf32>
    %4 = vector.shape_cast %3 : vector<8xf32> to vector<8x1xf32>
    %5 = arith.mulf %2, %2 : vector<8x512xf32>
    %cst_4 = arith.constant dense<0.000000e+00> : vector<8xf32>
    %6 = vector.multi_reduction <add>, %5, %cst_4 [1] : vector<8x512xf32> to vector<8xf32>
    %7 = vector.shape_cast %6 : vector<8xf32> to vector<8x1xf32>
    %cst_5 = arith.constant 0.001953125 : f32
    %8 = vector.broadcast %cst_5 : f32 to vector<8x1xf32>
    %9 = arith.mulf %4, %8 : vector<8x1xf32>
    %cst_6 = arith.constant 0.001953125 : f32
    %10 = vector.broadcast %cst_6 : f32 to vector<8x1xf32>
    %11 = arith.mulf %7, %10 : vector<8x1xf32>
    %12 = arith.mulf %9, %9 : vector<8x1xf32>
    %13 = arith.subf %11, %12 : vector<8x1xf32>
    %c0_7 = arith.constant 0 : index
    %c0_8 = arith.constant 0 : index
    %14 = vector.load %arg3[%c0_7, %c0_8] : memref<8x1xf32, #tpu.memory_space<vmem>>, vector<8x1xf32>
    %cst_9 = arith.constant 9.99999974E-6 : f32
    %15 = vector.broadcast %cst_9 : f32 to vector<8x1xf32>
    %16 = arith.addf %13, %15 : vector<8x1xf32>
    %17 = math.rsqrt %16 : vector<8x1xf32>
    %18 = arith.mulf %14, %17 : vector<8x1xf32>
    %c0_10 = arith.constant 0 : index
    %c0_11 = arith.constant 0 : index
    %19 = vector.load %arg4[%c0_10, %c0_11] : memref<8x1xf32, #tpu.memory_space<vmem>>, vector<8x1xf32>
    %20 = arith.mulf %9, %18 : vector<8x1xf32>
    %21 = arith.subf %19, %20 : vector<8x1xf32>
    %22 = vector.broadcast %18 : vector<8x1xf32> to vector<8x512xf32>
    %23 = arith.mulf %2, %22 : vector<8x512xf32>
    %24 = vector.broadcast %21 : vector<8x1xf32> to vector<8x512xf32>
    %25 = arith.addf %23, %24 : vector<8x512xf32>
    %cst_12 = arith.constant 0.000000e+00 : f32
    %26 = vector.broadcast %cst_12 : f32 to vector<8x512xf32>
    %27 = arith.maximumf %25, %26 : vector<8x512xf32>
    %c0_13 = arith.constant 0 : index
    %c0_14 = arith.constant 0 : index
    %28 = vector.load %arg5[%c0_13, %c0_14] : memref<8x512xf32, #tpu.memory_space<vmem>>, vector<8x512xf32>
    tpu.vector_store %arg5[%c0_13, %c0_14], %27 {strides = array<i32>} : memref<8x512xf32, #tpu.memory_space<vmem>>, vector<8x512xf32>,
    return
  }
  func.func @transform_0(%arg0: i32) -> (i32, i32) {
    %c0_i32 = arith.constant 0 : i32
    %c0_i32_0 = arith.constant 0 : i32
    %c0_i32_1 = arith.constant 0 : i32
    return %c0_i32, %c0_i32_0 : i32, i32
  }
  func.func @transform_1(%arg0: i32) -> (i32, i32) {
    %c0_i32 = arith.constant 0 : i32
    %c0_i32_0 = arith.constant 0 : i32
    %c0_i32_1 = arith.constant 0 : i32
    return %c0_i32, %c0_i32_0 : i32, i32
  }
  func.func @transform_2(%arg0: i32) -> (i32, i32) {
    %c0_i32 = arith.constant 0 : i32
    %c0_i32_0 = arith.constant 0 : i32
    %c0_i32_1 = arith.constant 0 : i32
    return %c0_i32, %c0_i32_0 : i32, i32
  }
  func.func @transform_3(%arg0: i32) -> (i32, i32) {
    %c0_i32 = arith.constant 0 : i32
    %c0_i32_0 = arith.constant 0 : i32
    %c0_i32_1 = arith.constant 0 : i32
    return %c0_i32, %c0_i32_0 : i32, i32
  }
  func.func @transform_4(%arg0: i32) -> (i32, i32) {
    %c0_i32 = arith.constant 0 : i32
    %c0_i32_0 = arith.constant 0 : i32
    %c0_i32_1 = arith.constant 0 : i32
    return %c0_i32, %c0_i32_0 : i32, i32
  }
}

</mosaic_0001>

<llo_original>
// kernel: basic_conv.1
$region0: #{basic_conv.1}
  #allocation0 [shape = 'u32[]', space=smem, size = 0x4, offset = 0x4, fixed_abs, tag = 'smem constant byte address 0x4 - core index']
  #allocation1 [shape = 'u32[144,128]{1,0:T(1,128)}', space=vmem, size = 0x12000, scoped, tag = 'internal scratch']
  %s0 = inlined_call_operand.vmem [shape: f32[8,36], index: 0, kind: input, shape index: {}]
  %s1 = inlined_call_operand.vmem [shape: f32[36,512], index: 1, kind: input, shape index: {}]
  %s2 = inlined_call_operand.vmem [shape: f32[8,1], index: 2, kind: input, shape index: {}]
  %s3 = inlined_call_operand.vmem [shape: f32[8,1], index: 3, kind: input, shape index: {}]
  %s4 = inlined_call_operand.vmem [shape: f32[8,512], index: 4, kind: output, shape index: {}]
  %s5 = sld [smem:[#allocation0]]
  $region26: #{basic_conv.1} parent=0
    _
  %s7 = ssub.s32 1, %s5
  %s8 = scalar_select 0, %s7, %s5
  // Predicated region
  $region2: #{basic_conv.1} parent=0 // pred_check
    _
  $region3: #{basic_conv.1} parent=0 // pred_check_branch
    %10 = sbr.rel (0) target = $region5
  $region4: #{basic_conv.1} parent=0 // pred_region
    _
  $region5: #{basic_conv.1} parent=0 // pred_fallthru
    _
  // Predicated region
  $region6: #{basic_conv.1} parent=0 // pred_check
    _
  $region7: #{basic_conv.1} parent=0 // pred_check_branch
    %12 = sbr.rel (0) target = $region9
  $region8: #{basic_conv.1} parent=0 // pred_region
    _
  $region9: #{basic_conv.1} parent=0 // pred_fallthru
    _
  // Predicated region
  $region10: #{basic_conv.1} parent=0 // pred_check
    _
  $region11: #{basic_conv.1} parent=0 // pred_check_branch
    %14 = sbr.rel (0) target = $region13
  $region12: #{basic_conv.1} parent=0 // pred_region
    _
  $region13: #{basic_conv.1} parent=0 // pred_fallthru
    _
  // Predicated region
  $region14: #{basic_conv.1} parent=0 // pred_check
    _
  $region15: #{basic_conv.1} parent=0 // pred_check_branch
    %16 = sbr.rel (0) target = $region17
  $region16: #{basic_conv.1} parent=0 // pred_region
    _
  $region17: #{basic_conv.1} parent=0 // pred_fallthru
    _
  %v17 = vld [vmem:[%s0] sm:$0xff]
  %v18 = vld [vmem:[%s1] sm:$0xff]
  %v19 = vld [vmem:[%s1 + $0x8] sm:$0xff]
  %v20 = vld [vmem:[%s1 + $0x10] sm:$0xff]
  %v21 = vld [vmem:[%s1 + $0x18] sm:$0xff]
  %v22 = vld [vmem:[%s1 + $0x20] sm:$0xff]
  %v23 = vld [vmem:[%s1 + $0x28] sm:$0xff]
  %v24 = vld [vmem:[%s1 + $0x30] sm:$0xff]
  %v25 = vld [vmem:[%s1 + $0x38] sm:$0xff]
  %v26 = vld [vmem:[%s1 + $0x40] sm:$0xff]
  %v27 = vld [vmem:[%s1 + $0x48] sm:$0xff]
  %v28 = vld [vmem:[%s1 + $0x50] sm:$0xff]
  %v29 = vld [vmem:[%s1 + $0x58] sm:$0xff]
  %v30 = vld [vmem:[%s1 + $0x60] sm:$0xff]
  %v31 = vld [vmem:[%s1 + $0x68] sm:$0xff]
  %v32 = vld [vmem:[%s1 + $0x70] sm:$0xff]
  %v33 = vld [vmem:[%s1 + $0x78] sm:$0xff]
  %v34 = vld [vmem:[%s1 + $0x80] sm:$0xf]
  %v35 = vld [vmem:[%s1 + $0x88] sm:$0xf]
  %v36 = vld [vmem:[%s1 + $0x90] sm:$0xf]
  %v37 = vld [vmem:[%s1 + $0x98] sm:$0xf]
  %vm38 = vcmask 293888
  %v40 = vsel %vm38, %v17, 0
  %vm42 = vcmask 1043456
  %v44 = vsel %vm42, %v34, 0
  %v47 = vsel %vm42, %v35, 0
  %v50 = vsel %vm42, %v36, 0
  %v53 = vsel %vm42, %v37, 0
  %55 = vmatprep.subr.mxu0 %v19
  %56 = vmatpush1.msra.mxu0 %v18
  %57 = vmatprep.subr.mxu0 %v23
  %58 = vmatpush1.msra.mxu0 %v22
  %59 = vmatprep.subr.mxu0 %v27
  %60 = vmatpush1.msra.mxu0 %v26
  %61 = vmatprep.subr.mxu0 %v31
  %62 = vmatpush1.msra.mxu0 %v30
  %63 = vmatprep.subr.mxu0 %v47
  %64 = vmatpush1.msra.mxu0 %v44
  %65 = vmatprep.subr.mxu0 0.0
  %66 = vmatpush1.msra.mxu0 0.0
  %67 = vmatprep.subr.mxu0 0.0
  %68 = vmatpush1.msra.mxu0 0.0
  %69 = vmatprep.subr.mxu0 0.0
  %70 = vmatpush1.msra.mxu0 0.0
  %71 = vmatprep.subr.mxu0 0.0
  %72 = vmatpush1.msra.mxu0 0.0
  %73 = vmatprep.subr.mxu0 0.0
  %74 = vmatpush1.msra.mxu0 0.0
  %75 = vmatprep.subr.mxu0 0.0
  %76 = vmatpush1.msra.mxu0 0.0
  %77 = vmatprep.subr.mxu0 0.0
  %78 = vmatpush1.msra.mxu0 0.0
  %79 = vmatprep.subr.mxu0 0.0
  %80 = vmatpush1.msra.mxu0 0.0
  %81 = vmatprep.subr.mxu0 0.0
  %82 = vmatpush1.msra.mxu0 0.0
  %83 = vmatprep.subr.mxu0 0.0
  %84 = vmatpush1.msra.mxu0 0.0
  %85 = vmatprep.subr.mxu0 0.0
  %86 = vmatpush1.msra.mxu0 0.0
  %87 = vmatprep.subr.mxu0 0.0
  %88 = vmatpush1.msra.mxu0 0.0
  %89 = vmatprep.subr.mxu0 0.0
  %90 = vmatpush1.msra.mxu0 0.0
  %91 = vmatprep.subr.mxu0 0.0
  %92 = vmatpush1.msra.mxu0 0.0
  %93 = vmatprep.subr.mxu0 0.0
  %94 = vmatpush1.msra.mxu0 0.0
  %95 = vmatprep.subr.mxu0 0.0
  %96 = vmatpush1.msra.mxu0 0.0
  %97 = vmatprep.subr.mxu0 0.0
  %98 = vmatpush1.msra.mxu0 0.0
  %99 = vmatprep.subr.mxu0 0.0
  %100 = vmatpush1.msra.mxu0 0.0
  %101 = vmatprep.subr.mxu0 0.0
  %102 = vmatpush1.msra.mxu0 0.0
  %103 = vmatprep.subr.mxu0 0.0
  %104 = vmatpush1.msra.mxu0 0.0
  %105 = vmatprep.subr.mxu0 0.0
  %106 = vmatpush1.msra.mxu0 0.0
  %107 = vmatprep.subr.mxu0 0.0
  %108 = vmatpush1.msra.mxu0 0.0
  %109 = vmatprep.subr.mxu0 0.0
  %110 = vmatpush1.msra.mxu0 0.0
  %111 = vmatprep.subr.mxu0 0.0
  %112 = vmatpush1.msra.mxu0 0.0
  %113 = vmatprep.subr.mxu0 0.0
  %114 = vmatpush1.msra.mxu0 0.0
  %115 = vmatprep.subr.mxu0 0.0
  %116 = vmatpush1.msra.mxu0 0.0
  %117 = vmatprep.subr.mxu0 0.0
  %118 = vmatpush1.msra.mxu0 0.0
  %119 = vmatprep.mubr.f32.mxu0 0.0
  %120 = vmatmul.mubr.f32.gmra.mrb[0].mxu0 %v40
  %v121 = vpop.f32.mrb[0].mxu0
  %v122 = vadd.f32 0.0, %v121
  %v123 = vpop.f32.mrb[0].mxu0
  %v124 = vadd.f32 0.0, %v123
  %125 = vdwg.mxu0
  %126 = vmatprep.subr.mxu0 %v21
  %127 = vmatpush1.msra.mxu0 %v20
  %128 = vmatprep.subr.mxu0 %v25
  %129 = vmatpush1.msra.mxu0 %v24
  %130 = vmatprep.subr.mxu0 %v29
  %131 = vmatpush1.msra.mxu0 %v28
  %132 = vmatprep.subr.mxu0 %v33
  %133 = vmatpush1.msra.mxu0 %v32
  %134 = vmatprep.subr.mxu0 %v53
  %135 = vmatpush1.msra.mxu0 %v50
  %136 = vmatprep.subr.mxu0 0.0
  %137 = vmatpush1.msra.mxu0 0.0
  %138 = vmatprep.subr.mxu0 0.0
  %139 = vmatpush1.msra.mxu0 0.0
  %140 = vmatprep.subr.mxu0 0.0
  %141 = vmatpush1.msra.mxu0 0.0
  %142 = vmatprep.subr.mxu0 0.0
  %143 = vmatpush1.msra.mxu0 0.0
  %144 = vmatprep.subr.mxu0 0.0
  %145 = vmatpush1.msra.mxu0 0.0
  %146 = vmatprep.subr.mxu0 0.0
  %147 = vmatpush1.msra.mxu0 0.0
  %148 = vmatprep.subr.mxu0 0.0
  %149 = vmatpush1.msra.mxu0 0.0
  %150 = vmatprep.subr.mxu0 0.0
  %151 = vmatpush1.msra.mxu0 0.0
  %152 = vmatprep.subr.mxu0 0.0
  %153 = vmatpush1.msra.mxu0 0.0
  %154 = vmatprep.subr.mxu0 0.0
  %155 = vmatpush1.msra.mxu0 0.0
  %156 = vmatprep.subr.mxu0 0.0
  %157 = vmatpush1.msra.mxu0 0.0
  %158 = vmatprep.subr.mxu0 0.0
  %159 = vmatpush1.msra.mxu0 0.0
  %160 = vmatprep.subr.mxu0 0.0
  %161 = vmatpush1.msra.mxu0 0.0
  %162 = vmatprep.subr.mxu0 0.0
  %163 = vmatpush1.msra.mxu0 0.0
  %164 = vmatprep.subr.mxu0 0.0
  %165 = vmatpush1.msra.mxu0 0.0
  %166 = vmatprep.subr.mxu0 0.0
  %167 = vmatpush1.msra.mxu0 0.0
  %168 = vmatprep.subr.mxu0 0.0
  %169 = vmatpush1.msra.mxu0 0.0
  %170 = vmatprep.subr.mxu0 0.0
  %171 = vmatpush1.msra.mxu0 0.0
  %172 = vmatprep.subr.mxu0 0.0
  %173 = vmatpush1.msra.mxu0 0.0
  %174 = vmatprep.subr.mxu0 0.0
  %175 = vmatpush1.msra.mxu0 0.0
  %176 = vmatprep.subr.mxu0 0.0
  %177 = vmatpush1.msra.mxu0 0.0
  %178 = vmatprep.subr.mxu0 0.0
  %179 = vmatpush1.msra.mxu0 0.0
  %180 = vmatprep.subr.mxu0 0.0
  %181 = vmatpush1.msra.mxu0 0.0
  %182 = vmatprep.subr.mxu0 0.0
  %183 = vmatpush1.msra.mxu0 0.0
  %184 = vmatprep.subr.mxu0 0.0
  %185 = vmatpush1.msra.mxu0 0.0
  %186 = vmatprep.subr.mxu0 0.0
  %187 = vmatpush1.msra.mxu0 0.0
  %188 = vmatprep.subr.mxu0 0.0
  %189 = vmatpush1.msra.mxu0 0.0
  %190 = vmatprep.mubr.f32.mxu0 0.0
  %191 = vmatmul.mubr.f32.gmra.mrb[0].mxu0 %v40
  %v192 = vpop.f32.mrb[0].mxu0
  %v193 = vadd.f32 0.0, %v192
  %v194 = vpop.f32.mrb[0].mxu0
  %v195 = vadd.f32 0.0, %v194
  %196 = vdwg.mxu0
  %v197 = vadd.f32 %v122, %v124
  %v198 = vadd.f32 %v197, %v193
  %v199 = vadd.f32 %v198, %v195
  %200 = vadd.xlane.f32.xlu0 %v199
  %v201 = vpop.xlane.xlu0 %200
  %v202 = vmul.f32 %v122, %v122
  %v203 = vmul.f32 %v124, %v124
  %v204 = vmul.f32 %v193, %v193
  %v205 = vmul.f32 %v195, %v195
  %v206 = vadd.f32 %v202, %v203
  %v207 = vadd.f32 %v206, %v204
  %v208 = vadd.f32 %v207, %v205
  %209 = vadd.xlane.f32.xlu0 %v208
  %v210 = vpop.xlane.xlu0 %209
  %v211 = vmul.f32 %v201, 0.001953125
  %v212 = vmul.f32 %v210, 0.001953125
  %v213 = vmul.f32 %v211, %v211
  %v214 = vsub.f32 %v212, %v213
  %v215 = vld [vmem:[%s2] sm:$0xff]
  %v216 = vadd.f32 %v214, 1e-05
  %v217 = vrsqrt.pop %v216
  %v218 = vmul.f32 %v215, %v217
  %v219 = vld [vmem:[%s3] sm:$0xff]
  %v220 = vmul.f32 %v211, %v218
  %v221 = vsub.f32 %v219, %v220
  %223 = vset.pattern.permute.xlu0 0
  %224 = vperm.xlu0 %223, %v218
  %v225 = vpop.permute.xlu0 %224
  %v227 = vmul.f32 %v122, %v225
  %v228 = vmul.f32 %v124, %v225
  %v229 = vmul.f32 %v193, %v225
  %v230 = vmul.f32 %v195, %v225
  %232 = vset.pattern.permute.xlu0 0
  %233 = vperm.xlu0 %232, %v221
  %v234 = vpop.permute.xlu0 %233
  %v236 = vadd.f32 %v227, %v234
  %v237 = vadd.f32 %v228, %v234
  %v238 = vadd.f32 %v229, %v234
  %v239 = vadd.f32 %v230, %v234
  %v240 = vmax.f32 %v236, 0.0
  %v241 = vmax.f32 %v237, 0.0
  %v242 = vmax.f32 %v238, 0.0
  %v243 = vmax.f32 %v239, 0.0
  %244 = vst [vmem:[%s4] sm:$0xff] %v240
  %245 = vst [vmem:[%s4 + $0x8] sm:$0xff] %v241
  %246 = vst [vmem:[%s4 + $0x10] sm:$0xff] %v242
  %247 = vst [vmem:[%s4 + $0x18] sm:$0xff] %v243
  // Predicated region
  $region18: #{basic_conv.1} parent=0 // pred_check
    _
  $region19: #{basic_conv.1} parent=0 // pred_check_branch
    %249 = sbr.rel (0) target = $region21
  $region20: #{basic_conv.1} parent=0 // pred_region
    _
  $region21: #{basic_conv.1} parent=0 // pred_fallthru
    _
  // Predicated region
  $region22: #{basic_conv.1} parent=0 // pred_check
    _
  $region23: #{basic_conv.1} parent=0 // pred_check_branch
    %251 = sbr.rel (0) target = $region25
  $region24: #{basic_conv.1} parent=0 // pred_region
    _
  $region25: #{basic_conv.1} parent=0 // pred_fallthru
    _

</llo_original>
